<compile_context>
chip_gen: v6e
topology: v6e:2x2x1
jax: 0.10.0
libtpu: 0.0.40
codegen_flags: <defaults>
</compile_context>

<pallas_src>
import jax
import jax.numpy as jnp
from jax.experimental import pallas as pl
from jax.experimental.pallas import tpu as pltpu


def _upsample_conv_concat_kernel(w_ref, b_ref, xw_ref, fm_ref, o_ref):
    """Fused 1x1 conv + nearest 2x H replication + channel concat.

    w_ref : SMEM (C, C)         conv weight w[out, in]
    b_ref : SMEM (C,)           conv bias
    xw_ref: VMEM (1, C, H, 2W)  input, already replicated 2x along W
    fm_ref: VMEM (1, C, H, 4W)  feature_map with full-res row pairs fused:
                                (2H, 2W) viewed as (H, 4W)
    o_ref : VMEM (1, 2C, H, 4W) output in the same fused-row-pair view
    """
    C = xw_ref.shape[1]
    for o in range(C):
        # Channel contraction on the VPU (MXU would be mostly padding at C=4).
        acc = xw_ref[0, 0] * w_ref[o, 0]
        for i in range(1, C):
            acc = acc + xw_ref[0, i] * w_ref[o, i]
        acc = acc + b_ref[o]
        # Full-res rows (2h, 2h+1) are adjacent along the lane axis of the
        # (H, 4W) view, so nearest 2x upsampling along H is a lane concat of
        # the low-res row block with itself.
        o_ref[0, o] = jnp.concatenate((acc, acc), axis=-1)
    # torch.cat((out, feature_map), dim=1): feature_map fills channels [C, 2C).
    o_ref[0, C:2 * C] = fm_ref[0]


def upsample_forward(x, feature_map, weight, bias):
    """Mirror of UpSample.forward.

    x:           (N, C, H, W)    NCHW f32
    feature_map: (N, C, 2H, 2W)  NCHW f32
    weight:      (C, C, 1, 1)    PyTorch Conv2d weight (out, in, 1, 1)
    bias:        (C,)
    returns:     (N, 2C, 2H, 2W) NCHW
    """
    N, C, H, W = x.shape
    W2 = 2 * W
    W4 = 4 * W

    # conv1x1(upsample(x)) == upsample(conv1x1(x)), so only the W replication
    # must precede the conv; it runs on the small input tensor.
    # TODO(synk): an in-kernel lane interleave would remove this XLA repeat,
    # but needs a minor-dim gather with no clean Mosaic lowering.
    xw = jnp.repeat(x, 2, axis=3)                          # (N, C, H, 2W)

    # Free contiguous view: fuse each full-res row pair onto the lane axis.
    fm_v = feature_map.reshape(N, C, H, W4)                # (N, C, H, 4W)
    w2d = weight.reshape(C, C)                             # (C_out, C_in)

    out_v = pl.pallas_call(
        _upsample_conv_concat_kernel,
        out_shape=jax.ShapeDtypeStruct((N, 2 * C, H, W4), x.dtype),
        grid_spec=pltpu.PrefetchScalarGridSpec(
            num_scalar_prefetch=0,
            grid=(N,),
            in_specs=[
                pl.BlockSpec(memory_space=pltpu.MemorySpace.SMEM),   # weight
                pl.BlockSpec(memory_space=pltpu.MemorySpace.SMEM),   # bias
                pl.BlockSpec((1, C, H, W2), lambda n: (n, 0, 0, 0)),
                pl.BlockSpec((1, C, H, W4), lambda n: (n, 0, 0, 0)),
            ],
            out_specs=pl.BlockSpec((1, 2 * C, H, W4),
                                   lambda n: (n, 0, 0, 0)),
        ),
        compiler_params=pltpu.CompilerParams(
            dimension_semantics=("parallel",),
        ),
    )(w2d, bias, xw, fm_v)

    # Free contiguous reshape back to NCHW full resolution.
    return out_v.reshape(N, 2 * C, 2 * H, W2)


if __name__ == "__main__":
    key = jax.random.PRNGKey(0)
    k_x, k_f, k_w, k_b = jax.random.split(key, 4)

    N, C, H, W = 2, 4, 16, 16
    x = jax.random.normal(k_x, (N, C, H, W), dtype=jnp.float32)
    feature_map = jax.random.normal(k_f, (N, C, 2 * H, 2 * W), dtype=jnp.float32)

    # Deterministic Conv2d(channel, channel, 1, 1) parameters (synthetic init).
    weight = jax.random.normal(k_w, (C, C, 1, 1), dtype=jnp.float32) * (1.0 / jnp.sqrt(C))
    bias = jax.random.normal(k_b, (C,), dtype=jnp.float32) * 0.1

    fwd = jax.jit(upsample_forward)
    out = jax.block_until_ready(fwd(x, feature_map, weight, bias))

    # Pure-JAX reference (exact f32 elementwise math, same forward pass).
    up_ref = jnp.repeat(jnp.repeat(x, 2, axis=2), 2, axis=3)           # (N,C,2H,2W)
    w2d_ref = weight[:, :, 0, 0]                                       # (C_out,C_in)
    conv_ref = (up_ref[:, None, :, :, :] *
                w2d_ref[None, :, :, None, None]).sum(axis=2) + bias[None, :, None, None]
    ref = jnp.concatenate((conv_ref, feature_map), axis=1)

    assert out.shape == (N, 2 * C, 2 * H, 2 * W), out.shape
    err = float(jnp.max(jnp.abs(out - ref)))
    assert jnp.allclose(out, ref, atol=1e-5, rtol=1e-5), err
    print("KERNEL_OK")
</pallas_src>

<mosaic_0001>
module attributes {stable_mosaic.version = 11 : i64} {
  func.func @_upsample_conv_concat_kernel(%arg0: i32, %arg1: memref<4x4xf32, #tpu.memory_space<smem>>, %arg2: memref<4xf32, #tpu.memory_space<smem>>, %arg3: memref<1x4x16x32xf32, #tpu.memory_space<vmem>>, %arg4: memref<1x4x16x64xf32, #tpu.memory_space<vmem>>, %arg5: memref<1x8x16x64xf32, #tpu.memory_space<vmem>>) attributes {dimension_semantics = [#tpu.dimension_semantics<parallel>], iteration_bounds = array<i64: 2>, scalar_prefetch = 0 : i64, scratch_operands = 0 : i64, tpu.core_type = #tpu.core_type<tc>, window_params = [{transform_indices = @transform_0, window_bounds = array<i64: 4, 4>}, {transform_indices = @transform_1, window_bounds = array<i64: 4>}, {transform_indices = @transform_2, window_bounds = array<i64: 1, 4, 16, 32>}, {transform_indices = @transform_3, window_bounds = array<i64: 1, 4, 16, 64>}, {transform_indices = @transform_4, window_bounds = array<i64: 1, 8, 16, 64>}]} {
    %c0 = arith.constant 0 : index
    %c0_0 = arith.constant 0 : index
    %c0_1 = arith.constant 0 : index
    %c0_2 = arith.constant 0 : index
    %0 = vector.load %arg3[%c0, %c0_0, %c0_1, %c0_2] : memref<1x4x16x32xf32, #tpu.memory_space<vmem>>, vector<1x1x16x32xf32>
    %1 = vector.shape_cast %0 : vector<1x1x16x32xf32> to vector<16x32xf32>
    %c0_3 = arith.constant 0 : index
    %c0_4 = arith.constant 0 : index
    %2 = memref.load %arg1[%c0_3, %c0_4] : memref<4x4xf32, #tpu.memory_space<smem>>
    %3 = vector.broadcast %2 : f32 to vector<16x32xf32>
    %4 = arith.mulf %1, %3 : vector<16x32xf32>
    %c0_5 = arith.constant 0 : index
    %c1 = arith.constant 1 : index
    %c0_6 = arith.constant 0 : index
    %c0_7 = arith.constant 0 : index
    %5 = vector.load %arg3[%c0_5, %c1, %c0_6, %c0_7] : memref<1x4x16x32xf32, #tpu.memory_space<vmem>>, vector<1x1x16x32xf32>
    %6 = vector.shape_cast %5 : vector<1x1x16x32xf32> to vector<16x32xf32>
    %c0_8 = arith.constant 0 : index
    %c1_9 = arith.constant 1 : index
    %7 = memref.load %arg1[%c0_8, %c1_9] : memref<4x4xf32, #tpu.memory_space<smem>>
    %8 = vector.broadcast %7 : f32 to vector<16x32xf32>
    %9 = arith.mulf %6, %8 : vector<16x32xf32>
    %10 = arith.addf %4, %9 : vector<16x32xf32>
    %c0_10 = arith.constant 0 : index
    %c2 = arith.constant 2 : index
    %c0_11 = arith.constant 0 : index
    %c0_12 = arith.constant 0 : index
    %11 = vector.load %arg3[%c0_10, %c2, %c0_11, %c0_12] : memref<1x4x16x32xf32, #tpu.memory_space<vmem>>, vector<1x1x16x32xf32>
    %12 = vector.shape_cast %11 : vector<1x1x16x32xf32> to vector<16x32xf32>
    %c0_13 = arith.constant 0 : index
    %c2_14 = arith.constant 2 : index
    %13 = memref.load %arg1[%c0_13, %c2_14] : memref<4x4xf32, #tpu.memory_space<smem>>
    %14 = vector.broadcast %13 : f32 to vector<16x32xf32>
    %15 = arith.mulf %12, %14 : vector<16x32xf32>
    %16 = arith.addf %10, %15 : vector<16x32xf32>
    %c0_15 = arith.constant 0 : index
    %c3 = arith.constant 3 : index
    %c0_16 = arith.constant 0 : index
    %c0_17 = arith.constant 0 : index
    %17 = vector.load %arg3[%c0_15, %c3, %c0_16, %c0_17] : memref<1x4x16x32xf32, #tpu.memory_space<vmem>>, vector<1x1x16x32xf32>
    %18 = vector.shape_cast %17 : vector<1x1x16x32xf32> to vector<16x32xf32>
    %c0_18 = arith.constant 0 : index
    %c3_19 = arith.constant 3 : index
    %19 = memref.load %arg1[%c0_18, %c3_19] : memref<4x4xf32, #tpu.memory_space<smem>>
    %20 = vector.broadcast %19 : f32 to vector<16x32xf32>
    %21 = arith.mulf %18, %20 : vector<16x32xf32>
    %22 = arith.addf %16, %21 : vector<16x32xf32>
    %c0_20 = arith.constant 0 : index
    %23 = memref.load %arg2[%c0_20] : memref<4xf32, #tpu.memory_space<smem>>
    %24 = vector.broadcast %23 : f32 to vector<16x32xf32>
    %25 = arith.addf %22, %24 : vector<16x32xf32>
    %26 = tpu.concatenate %25, %25 in 1 : vector<16x32xf32>, vector<16x32xf32> -> vector<16x64xf32>
    %c0_21 = arith.constant 0 : index
    %c0_22 = arith.constant 0 : index
    %c0_23 = arith.constant 0 : index
    %c0_24 = arith.constant 0 : index
    %27 = vector.load %arg5[%c0_21, %c0_22, %c0_23, %c0_24] : memref<1x8x16x64xf32, #tpu.memory_space<vmem>>, vector<1x1x16x64xf32>
    %28 = vector.shape_cast %27 : vector<1x1x16x64xf32> to vector<16x64xf32>
    %29 = vector.shape_cast %26 : vector<16x64xf32> to vector<1x1x16x64xf32>
    tpu.vector_store %arg5[%c0_21, %c0_22, %c0_23, %c0_24], %29 {strides = array<i32>} : memref<1x8x16x64xf32, #tpu.memory_space<vmem>>, vector<1x1x16x64xf32>,
    %c0_25 = arith.constant 0 : index
    %c0_26 = arith.constant 0 : index
    %c0_27 = arith.constant 0 : index
    %c0_28 = arith.constant 0 : index
    %30 = vector.load %arg3[%c0_25, %c0_26, %c0_27, %c0_28] : memref<1x4x16x32xf32, #tpu.memory_space<vmem>>, vector<1x1x16x32xf32>
    %31 = vector.shape_cast %30 : vector<1x1x16x32xf32> to vector<16x32xf32>
    %c1_29 = arith.constant 1 : index
    %c0_30 = arith.constant 0 : index
    %32 = memref.load %arg1[%c1_29, %c0_30] : memref<4x4xf32, #tpu.memory_space<smem>>
    %33 = vector.broadcast %32 : f32 to vector<16x32xf32>
    %34 = arith.mulf %31, %33 : vector<16x32xf32>
    %c0_31 = arith.constant 0 : index
    %c1_32 = arith.constant 1 : index
    %c0_33 = arith.constant 0 : index
    %c0_34 = arith.constant 0 : index
    %35 = vector.load %arg3[%c0_31, %c1_32, %c0_33, %c0_34] : memref<1x4x16x32xf32, #tpu.memory_space<vmem>>, vector<1x1x16x32xf32>
    %36 = vector.shape_cast %35 : vector<1x1x16x32xf32> to vector<16x32xf32>
    %c1_35 = arith.constant 1 : index
    %c1_36 = arith.constant 1 : index
    %37 = memref.load %arg1[%c1_35, %c1_36] : memref<4x4xf32, #tpu.memory_space<smem>>
    %38 = vector.broadcast %37 : f32 to vector<16x32xf32>
    %39 = arith.mulf %36, %38 : vector<16x32xf32>
    %40 = arith.addf %34, %39 : vector<16x32xf32>
    %c0_37 = arith.constant 0 : index
    %c2_38 = arith.constant 2 : index
    %c0_39 = arith.constant 0 : index
    %c0_40 = arith.constant 0 : index
    %41 = vector.load %arg3[%c0_37, %c2_38, %c0_39, %c0_40] : memref<1x4x16x32xf32, #tpu.memory_space<vmem>>, vector<1x1x16x32xf32>
    %42 = vector.shape_cast %41 : vector<1x1x16x32xf32> to vector<16x32xf32>
    %c1_41 = arith.constant 1 : index
    %c2_42 = arith.constant 2 : index
    %43 = memref.load %arg1[%c1_41, %c2_42] : memref<4x4xf32, #tpu.memory_space<smem>>
    %44 = vector.broadcast %43 : f32 to vector<16x32xf32>
    %45 = arith.mulf %42, %44 : vector<16x32xf32>
    %46 = arith.addf %40, %45 : vector<16x32xf32>
    %c0_43 = arith.constant 0 : index
    %c3_44 = arith.constant 3 : index
    %c0_45 = arith.constant 0 : index
    %c0_46 = arith.constant 0 : index
    %47 = vector.load %arg3[%c0_43, %c3_44, %c0_45, %c0_46] : memref<1x4x16x32xf32, #tpu.memory_space<vmem>>, vector<1x1x16x32xf32>
    %48 = vector.shape_cast %47 : vector<1x1x16x32xf32> to vector<16x32xf32>
    %c1_47 = arith.constant 1 : index
    %c3_48 = arith.constant 3 : index
    %49 = memref.load %arg1[%c1_47, %c3_48] : memref<4x4xf32, #tpu.memory_space<smem>>
    %50 = vector.broadcast %49 : f32 to vector<16x32xf32>
    %51 = arith.mulf %48, %50 : vector<16x32xf32>
    %52 = arith.addf %46, %51 : vector<16x32xf32>
    %c1_49 = arith.constant 1 : index
    %53 = memref.load %arg2[%c1_49] : memref<4xf32, #tpu.memory_space<smem>>
    %54 = vector.broadcast %53 : f32 to vector<16x32xf32>
    %55 = arith.addf %52, %54 : vector<16x32xf32>
    %56 = tpu.concatenate %55, %55 in 1 : vector<16x32xf32>, vector<16x32xf32> -> vector<16x64xf32>
    %c0_50 = arith.constant 0 : index
    %c1_51 = arith.constant 1 : index
    %c0_52 = arith.constant 0 : index
    %c0_53 = arith.constant 0 : index
    %57 = vector.load %arg5[%c0_50, %c1_51, %c0_52, %c0_53] : memref<1x8x16x64xf32, #tpu.memory_space<vmem>>, vector<1x1x16x64xf32>
    %58 = vector.shape_cast %57 : vector<1x1x16x64xf32> to vector<16x64xf32>
    %59 = vector.shape_cast %56 : vector<16x64xf32> to vector<1x1x16x64xf32>
    tpu.vector_store %arg5[%c0_50, %c1_51, %c0_52, %c0_53], %59 {strides = array<i32>} : memref<1x8x16x64xf32, #tpu.memory_space<vmem>>, vector<1x1x16x64xf32>,
    %c0_54 = arith.constant 0 : index
    %c0_55 = arith.constant 0 : index
    %c0_56 = arith.constant 0 : index
    %c0_57 = arith.constant 0 : index
    %60 = vector.load %arg3[%c0_54, %c0_55, %c0_56, %c0_57] : memref<1x4x16x32xf32, #tpu.memory_space<vmem>>, vector<1x1x16x32xf32>
    %61 = vector.shape_cast %60 : vector<1x1x16x32xf32> to vector<16x32xf32>
    %c2_58 = arith.constant 2 : index
    %c0_59 = arith.constant 0 : index
    %62 = memref.load %arg1[%c2_58, %c0_59] : memref<4x4xf32, #tpu.memory_space<smem>>
    %63 = vector.broadcast %62 : f32 to vector<16x32xf32>
    %64 = arith.mulf %61, %63 : vector<16x32xf32>
    %c0_60 = arith.constant 0 : index
    %c1_61 = arith.constant 1 : index
    %c0_62 = arith.constant 0 : index
    %c0_63 = arith.constant 0 : index
    %65 = vector.load %arg3[%c0_60, %c1_61, %c0_62, %c0_63] : memref<1x4x16x32xf32, #tpu.memory_space<vmem>>, vector<1x1x16x32xf32>
    %66 = vector.shape_cast %65 : vector<1x1x16x32xf32> to vector<16x32xf32>
    %c2_64 = arith.constant 2 : index
    %c1_65 = arith.constant 1 : index
    %67 = memref.load %arg1[%c2_64, %c1_65] : memref<4x4xf32, #tpu.memory_space<smem>>
    %68 = vector.broadcast %67 : f32 to vector<16x32xf32>
    %69 = arith.mulf %66, %68 : vector<16x32xf32>
    %70 = arith.addf %64, %69 : vector<16x32xf32>
    %c0_66 = arith.constant 0 : index
    %c2_67 = arith.constant 2 : index
    %c0_68 = arith.constant 0 : index
    %c0_69 = arith.constant 0 : index
    %71 = vector.load %arg3[%c0_66, %c2_67, %c0_68, %c0_69] : memref<1x4x16x32xf32, #tpu.memory_space<vmem>>, vector<1x1x16x32xf32>
    %72 = vector.shape_cast %71 : vector<1x1x16x32xf32> to vector<16x32xf32>
    %c2_70 = arith.constant 2 : index
    %c2_71 = arith.constant 2 : index
    %73 = memref.load %arg1[%c2_70, %c2_71] : memref<4x4xf32, #tpu.memory_space<smem>>
    %74 = vector.broadcast %73 : f32 to vector<16x32xf32>
    %75 = arith.mulf %72, %74 : vector<16x32xf32>
    %76 = arith.addf %70, %75 : vector<16x32xf32>
    %c0_72 = arith.constant 0 : index
    %c3_73 = arith.constant 3 : index
    %c0_74 = arith.constant 0 : index
    %c0_75 = arith.constant 0 : index
    %77 = vector.load %arg3[%c0_72, %c3_73, %c0_74, %c0_75] : memref<1x4x16x32xf32, #tpu.memory_space<vmem>>, vector<1x1x16x32xf32>
    %78 = vector.shape_cast %77 : vector<1x1x16x32xf32> to vector<16x32xf32>
    %c2_76 = arith.constant 2 : index
    %c3_77 = arith.constant 3 : index
    %79 = memref.load %arg1[%c2_76, %c3_77] : memref<4x4xf32, #tpu.memory_space<smem>>
    %80 = vector.broadcast %79 : f32 to vector<16x32xf32>
    %81 = arith.mulf %78, %80 : vector<16x32xf32>
    %82 = arith.addf %76, %81 : vector<16x32xf32>
    %c2_78 = arith.constant 2 : index
    %83 = memref.load %arg2[%c2_78] : memref<4xf32, #tpu.memory_space<smem>>
    %84 = vector.broadcast %83 : f32 to vector<16x32xf32>
    %85 = arith.addf %82, %84 : vector<16x32xf32>
    %86 = tpu.concatenate %85, %85 in 1 : vector<16x32xf32>, vector<16x32xf32> -> vector<16x64xf32>
    %c0_79 = arith.constant 0 : index
    %c2_80 = arith.constant 2 : index
    %c0_81 = arith.constant 0 : index
    %c0_82 = arith.constant 0 : index
    %87 = vector.load %arg5[%c0_79, %c2_80, %c0_81, %c0_82] : memref<1x8x16x64xf32, #tpu.memory_space<vmem>>, vector<1x1x16x64xf32>
    %88 = vector.shape_cast %87 : vector<1x1x16x64xf32> to vector<16x64xf32>
    %89 = vector.shape_cast %86 : vector<16x64xf32> to vector<1x1x16x64xf32>
    tpu.vector_store %arg5[%c0_79, %c2_80, %c0_81, %c0_82], %89 {strides = array<i32>} : memref<1x8x16x64xf32, #tpu.memory_space<vmem>>, vector<1x1x16x64xf32>,
    %c0_83 = arith.constant 0 : index
    %c0_84 = arith.constant 0 : index
    %c0_85 = arith.constant 0 : index
    %c0_86 = arith.constant 0 : index
    %90 = vector.load %arg3[%c0_83, %c0_84, %c0_85, %c0_86] : memref<1x4x16x32xf32, #tpu.memory_space<vmem>>, vector<1x1x16x32xf32>
    %91 = vector.shape_cast %90 : vector<1x1x16x32xf32> to vector<16x32xf32>
    %c3_87 = arith.constant 3 : index
    %c0_88 = arith.constant 0 : index
    %92 = memref.load %arg1[%c3_87, %c0_88] : memref<4x4xf32, #tpu.memory_space<smem>>
    %93 = vector.broadcast %92 : f32 to vector<16x32xf32>
    %94 = arith.mulf %91, %93 : vector<16x32xf32>
    %c0_89 = arith.constant 0 : index
    %c1_90 = arith.constant 1 : index
    %c0_91 = arith.constant 0 : index
    %c0_92 = arith.constant 0 : index
    %95 = vector.load %arg3[%c0_89, %c1_90, %c0_91, %c0_92] : memref<1x4x16x32xf32, #tpu.memory_space<vmem>>, vector<1x1x16x32xf32>
    %96 = vector.shape_cast %95 : vector<1x1x16x32xf32> to vector<16x32xf32>
    %c3_93 = arith.constant 3 : index
    %c1_94 = arith.constant 1 : index
    %97 = memref.load %arg1[%c3_93, %c1_94] : memref<4x4xf32, #tpu.memory_space<smem>>
    %98 = vector.broadcast %97 : f32 to vector<16x32xf32>
    %99 = arith.mulf %96, %98 : vector<16x32xf32>
    %100 = arith.addf %94, %99 : vector<16x32xf32>
    %c0_95 = arith.constant 0 : index
    %c2_96 = arith.constant 2 : index
    %c0_97 = arith.constant 0 : index
    %c0_98 = arith.constant 0 : index
    %101 = vector.load %arg3[%c0_95, %c2_96, %c0_97, %c0_98] : memref<1x4x16x32xf32, #tpu.memory_space<vmem>>, vector<1x1x16x32xf32>
    %102 = vector.shape_cast %101 : vector<1x1x16x32xf32> to vector<16x32xf32>
    %c3_99 = arith.constant 3 : index
    %c2_100 = arith.constant 2 : index
    %103 = memref.load %arg1[%c3_99, %c2_100] : memref<4x4xf32, #tpu.memory_space<smem>>
    %104 = vector.broadcast %103 : f32 to vector<16x32xf32>
    %105 = arith.mulf %102, %104 : vector<16x32xf32>
    %106 = arith.addf %100, %105 : vector<16x32xf32>
    %c0_101 = arith.constant 0 : index
    %c3_102 = arith.constant 3 : index
    %c0_103 = arith.constant 0 : index
    %c0_104 = arith.constant 0 : index
    %107 = vector.load %arg3[%c0_101, %c3_102, %c0_103, %c0_104] : memref<1x4x16x32xf32, #tpu.memory_space<vmem>>, vector<1x1x16x32xf32>
    %108 = vector.shape_cast %107 : vector<1x1x16x32xf32> to vector<16x32xf32>
    %c3_105 = arith.constant 3 : index
    %c3_106 = arith.constant 3 : index
    %109 = memref.load %arg1[%c3_105, %c3_106] : memref<4x4xf32, #tpu.memory_space<smem>>
    %110 = vector.broadcast %109 : f32 to vector<16x32xf32>
    %111 = arith.mulf %108, %110 : vector<16x32xf32>
    %112 = arith.addf %106, %111 : vector<16x32xf32>
    %c3_107 = arith.constant 3 : index
    %113 = memref.load %arg2[%c3_107] : memref<4xf32, #tpu.memory_space<smem>>
    %114 = vector.broadcast %113 : f32 to vector<16x32xf32>
    %115 = arith.addf %112, %114 : vector<16x32xf32>
    %116 = tpu.concatenate %115, %115 in 1 : vector<16x32xf32>, vector<16x32xf32> -> vector<16x64xf32>
    %c0_108 = arith.constant 0 : index
    %c3_109 = arith.constant 3 : index
    %c0_110 = arith.constant 0 : index
    %c0_111 = arith.constant 0 : index
    %117 = vector.load %arg5[%c0_108, %c3_109, %c0_110, %c0_111] : memref<1x8x16x64xf32, #tpu.memory_space<vmem>>, vector<1x1x16x64xf32>
    %118 = vector.shape_cast %117 : vector<1x1x16x64xf32> to vector<16x64xf32>
    %119 = vector.shape_cast %116 : vector<16x64xf32> to vector<1x1x16x64xf32>
    tpu.vector_store %arg5[%c0_108, %c3_109, %c0_110, %c0_111], %119 {strides = array<i32>} : memref<1x8x16x64xf32, #tpu.memory_space<vmem>>, vector<1x1x16x64xf32>,
    %c0_112 = arith.constant 0 : index
    %c0_113 = arith.constant 0 : index
    %c0_114 = arith.constant 0 : index
    %c0_115 = arith.constant 0 : index
    %120 = vector.load %arg4[%c0_112, %c0_113, %c0_114, %c0_115] : memref<1x4x16x64xf32, #tpu.memory_space<vmem>>, vector<1x4x16x64xf32>
    %121 = vector.shape_cast %120 : vector<1x4x16x64xf32> to vector<4x16x64xf32>
    %c0_116 = arith.constant 0 : index
    %c4 = arith.constant 4 : index
    %c0_117 = arith.constant 0 : index
    %c0_118 = arith.constant 0 : index
    %122 = vector.load %arg5[%c0_116, %c4, %c0_117, %c0_118] : memref<1x8x16x64xf32, #tpu.memory_space<vmem>>, vector<1x4x16x64xf32>
    %123 = vector.shape_cast %122 : vector<1x4x16x64xf32> to vector<4x16x64xf32>
    %124 = vector.shape_cast %121 : vector<4x16x64xf32> to vector<1x4x16x64xf32>
    tpu.vector_store %arg5[%c0_116, %c4, %c0_117, %c0_118], %124 {strides = array<i32>} : memref<1x8x16x64xf32, #tpu.memory_space<vmem>>, vector<1x4x16x64xf32>,
    return
  }
  func.func @transform_0(%arg0: i32) -> (i32, i32) {
    %c0_i32 = arith.constant 0 : i32
    %c0_i32_0 = arith.constant 0 : i32
    %c0_i32_1 = arith.constant 0 : i32
    return %c0_i32, %c0_i32_0 : i32, i32
  }
  func.func @transform_1(%arg0: i32) -> i32 {
    %c0_i32 = arith.constant 0 : i32
    %c0_i32_0 = arith.constant 0 : i32
    return %c0_i32 : i32
  }
  func.func @transform_2(%arg0: i32) -> (i32, i32, i32, i32) {
    %c0_i32 = arith.constant 0 : i32
    %c0_i32_0 = arith.constant 0 : i32
    %c0_i32_1 = arith.constant 0 : i32
    %c0_i32_2 = arith.constant 0 : i32
    return %arg0, %c0_i32, %c0_i32_0, %c0_i32_1 : i32, i32, i32, i32
  }
  func.func @transform_3(%arg0: i32) -> (i32, i32, i32, i32) {
    %c0_i32 = arith.constant 0 : i32
    %c0_i32_0 = arith.constant 0 : i32
    %c0_i32_1 = arith.constant 0 : i32
    %c0_i32_2 = arith.constant 0 : i32
    return %arg0, %c0_i32, %c0_i32_0, %c0_i32_1 : i32, i32, i32, i32
  }
  func.func @transform_4(%arg0: i32) -> (i32, i32, i32, i32) {
    %c0_i32 = arith.constant 0 : i32
    %c0_i32_0 = arith.constant 0 : i32
    %c0_i32_1 = arith.constant 0 : i32
    %c0_i32_2 = arith.constant 0 : i32
    return %arg0, %c0_i32, %c0_i32_0, %c0_i32_1 : i32, i32, i32, i32
  }
}

</mosaic_0001>

<llo_original>
// kernel: upsample_forward.1
$region0: #{upsample_forward.1}
  #allocation0 [shape = 'u32[]', space=smem, size = 0x4, offset = 0x4, fixed_abs, tag = 'smem constant byte address 0x4 - core index']
  #allocation1 [shape = 'u32[144,128]{1,0:T(1,128)}', space=vmem, size = 0x12000, scoped, tag = 'internal scratch']
  %s0 = inlined_call_operand.vmem [shape: f32[4,4], index: 0, kind: input, shape index: {}]
  %s1 = inlined_call_operand.vmem [shape: f32[4], index: 1, kind: input, shape index: {}]
  %s2 = inlined_call_operand.vmem [shape: f32[2,4,16,32], index: 2, kind: input, shape index: {}]
  %s3 = inlined_call_operand.vmem [shape: f32[2,4,16,64], index: 3, kind: input, shape index: {}]
  %s4 = inlined_call_operand.vmem [shape: f32[2,8,16,64], index: 4, kind: output, shape index: {}]
  %s5 = sld [smem:[#allocation0]]
  $region57: #{upsample_forward.1} parent=0
    _
  %s7 = ssub.s32 1, %s5
  %s8 = scalar_select 0, %s7, %s5
  $region1: #{upsample_forward.1} parent=0
    #allocation2 [shape = 'u8[2048]{0}', space=smem, size = 0x800, scoped, tag = 'input window, operand 0, single buffered']
    #allocation3 [shape = 's32[2]{0}', space=sflag, size = 0x8, scoped, tag = 'scoped memory for upsample_forward.1']
    #allocation4 [shape = 'u8[512]{0}', space=smem, size = 0x200, scoped, tag = 'input window, operand 1, single buffered']
    #allocation5 [shape = 's32[1]{0}', space=sflag, size = 0x4, scoped, tag = 'scoped memory for upsample_forward.1']
    %9 = vsyncpa [#allocation3], 0
    %10 = vsyncpa [#allocation5], 0
    loop: start=0, step=1, limit=4
    $region2: #{upsample_forward.1} parent=1 // loop_pre_header
      _
    $region3: #{upsample_forward.1} parent=1 // loop_header
      %s12 = sphi 0, %s16
      %p13 = scmp.ge.s32.totalorder %s12, 4
      %s20 = sphi 0, %s20
      %s22 = sphi 0, %s20
      %s23 = sphi 0, %s22
      %s37 = sphi 0, %s23
      %s41 = sphi 0, %s41
      %s43 = sphi 0, %s41
      %s44 = sphi 0, %s43
      %s58 = sphi 0, %s44
      %s64 = sphi 0, %s66
      %s67 = sphi 0, %s64
      %s68 = sphi 0, %s67
      %s84 = sphi 0, %s68
      %s90 = sphi 0, %s92
      %s93 = sphi 0, %s90
      %s94 = sphi 0, %s93
      %s110 = sphi 0, %s94
      %s116 = sphi 0, %s118
      %s119 = sphi 0, %s116
      %s120 = sphi 0, %s119
      %s136 = sphi 0, %s120
    $region4: #{upsample_forward.1} parent=1 // loop_header_branch
      %15 = sbr.rel (%p13) target = $region8
    $region5: #{upsample_forward.1} parent=1 // loop_body
      %s17 = ssub.s32 %s12, 1
      %s18 = ssub.s32 %s12, 2
      %s19 = sadd.s32 %s12, 1
      %s21 = sadd.s32 %s20, 1
      %p24 = scmp.eq.s32.totalorder %s12, 1
      %p25 = scmp.ne.s32.totalorder %s20, %s22
      %p26 = scmp.eq.s32.totalorder %s12, 0
      %p27 = por %p25, %p26
      %p28 = scmp.ne.s32.totalorder %s20, %s22
      %p29 = scmp.eq.s32.totalorder %s17, 1
      %p30 = por %p28, %p29
      %p31 = scmp.ne.s32.totalorder %s22, %s23
      %p32 = scmp.eq.s32.totalorder %s17, 0
      %p33 = por %p31, %p32
      %p34 = scmp.ne.s32.totalorder %s22, %s23
      %p35 = scmp.eq.s32.totalorder %s18, 1
      %p36 = por %p34, %p35
      %p38 = scmp.ne.s32.totalorder %s23, %s37
      %p39 = scmp.eq.s32.totalorder %s18, 0
      %p40 = por %p38, %p39
      %s42 = sadd.s32 %s41, 1
      %p45 = scmp.eq.s32.totalorder %s12, 1
      %p46 = scmp.ne.s32.totalorder %s41, %s43
      %p47 = scmp.eq.s32.totalorder %s12, 0
      %p48 = por %p46, %p47
      %p49 = scmp.ne.s32.totalorder %s41, %s43
      %p50 = scmp.eq.s32.totalorder %s17, 1
      %p51 = por %p49, %p50
      %p52 = scmp.ne.s32.totalorder %s43, %s44
      %p53 = scmp.eq.s32.totalorder %s17, 0
      %p54 = por %p52, %p53
      %p55 = scmp.ne.s32.totalorder %s43, %s44
      %p56 = scmp.eq.s32.totalorder %s18, 1
      %p57 = por %p55, %p56
      %p59 = scmp.ne.s32.totalorder %s44, %s58
      %p60 = scmp.eq.s32.totalorder %s18, 0
      %p61 = por %p59, %p60
      %s62 = ssub.s32 %s12, %s19
      %p63 = scmp.eq.s32.totalorder %s62, 0
      %s65 = sadd.s32 %s64, 1
      %s66 = scalar_select %p63, %s64, %s65
      %p69 = pneg %p63
      %p70 = scmp.eq.s32.totalorder %s12, 1
      %p71 = por %p69, %p70
      %p72 = scmp.ne.s32.totalorder %s64, %s67
      %p73 = scmp.eq.s32.totalorder %s12, 0
      %p74 = por %p72, %p73
      %p75 = scmp.ne.s32.totalorder %s64, %s67
      %p76 = scmp.eq.s32.totalorder %s17, 1
      %p77 = por %p75, %p76
      %p78 = scmp.ne.s32.totalorder %s67, %s68
      %p79 = scmp.eq.s32.totalorder %s17, 0
      %p80 = por %p78, %p79
      %p81 = scmp.ne.s32.totalorder %s67, %s68
      %p82 = scmp.eq.s32.totalorder %s18, 1
      %p83 = por %p81, %p82
      %p85 = scmp.ne.s32.totalorder %s68, %s84
      %p86 = scmp.eq.s32.totalorder %s18, 0
      %p87 = por %p85, %p86
      %s88 = ssub.s32 %s12, %s19
      %p89 = scmp.eq.s32.totalorder %s88, 0
      %s91 = sadd.s32 %s90, 1
      %s92 = scalar_select %p89, %s90, %s91
      %p95 = pneg %p89
      %p96 = scmp.eq.s32.totalorder %s12, 1
      %p97 = por %p95, %p96
      %p98 = scmp.ne.s32.totalorder %s90, %s93
      %p99 = scmp.eq.s32.totalorder %s12, 0
      %p100 = por %p98, %p99
      %p101 = scmp.ne.s32.totalorder %s90, %s93
      %p102 = scmp.eq.s32.totalorder %s17, 1
      %p103 = por %p101, %p102
      %p104 = scmp.ne.s32.totalorder %s93, %s94
      %p105 = scmp.eq.s32.totalorder %s17, 0
      %p106 = por %p104, %p105
      %p107 = scmp.ne.s32.totalorder %s93, %s94
      %p108 = scmp.eq.s32.totalorder %s18, 1
      %p109 = por %p107, %p108
      %p111 = scmp.ne.s32.totalorder %s94, %s110
      %p112 = scmp.eq.s32.totalorder %s18, 0
      %p113 = por %p111, %p112
      %s114 = ssub.s32 %s12, %s19
      %p115 = scmp.eq.s32.totalorder %s114, 0
      %s117 = sadd.s32 %s116, 1
      %s118 = scalar_select %p115, %s116, %s117
      %p121 = pneg %p115
      %p122 = scmp.eq.s32.totalorder %s12, 1
      %p123 = por %p121, %p122
      %p124 = scmp.ne.s32.totalorder %s116, %s119
      %p125 = scmp.eq.s32.totalorder %s12, 0
      %p126 = por %p124, %p125
      %p127 = scmp.ne.s32.totalorder %s116, %s119
      %p128 = scmp.eq.s32.totalorder %s17, 1
      %p129 = por %p127, %p128
      %p130 = scmp.ne.s32.totalorder %s119, %s120
      %p131 = scmp.eq.s32.totalorder %s17, 0
      %p132 = por %p130, %p131
      %p133 = scmp.ne.s32.totalorder %s119, %s120
      %p134 = scmp.eq.s32.totalorder %s18, 1
      %p135 = por %p133, %p134
      %p137 = scmp.ne.s32.totalorder %s120, %s136
      %p138 = scmp.eq.s32.totalorder %s18, 0
      %p139 = por %p137, %p138
      %p140 = scmp.le.s32.totalorder 1, %s12
      %p141 = scmp.lt.s32.totalorder %s12, 3
      %p142 = pnand %p140, %p141
      %p143 = pneg %p142
      // Predicated region
      $region9: #{upsample_forward.1} parent=5 // pred_check
        _
      $region10: #{upsample_forward.1} parent=5 // pred_check_branch
        %145 = sbr.rel (%p142) target = $region12
      $region11: #{upsample_forward.1} parent=5 // pred_region
        %s146 = ssub.s32 %s12, 1
        // Predicated region
        $region13: #{upsample_forward.1} parent=11 // pred_check
          %p147 = pneg %p33
        $region14: #{upsample_forward.1} parent=11 // pred_check_branch
          %149 = sbr.rel (%p147) target = $region16
        $region15: #{upsample_forward.1} parent=11 // pred_region
          %s151 = ssub.s32 64, 64
          %152 = vsyncadd [#allocation3], %s151
          %s154 = sshll.u32 %s0, 4
          %s155 = int_to_ptr.vmem [resolvable:$true] %s154
          %157 = dma.vmem_to_smem %s155, 64, [#allocation2], [#allocation3]
        $region16: #{upsample_forward.1} parent=11 // pred_fallthru
          _
        // Predicated region
        $region17: #{upsample_forward.1} parent=11 // pred_check
          %p158 = pneg %p54
        $region18: #{upsample_forward.1} parent=11 // pred_check_branch
          %160 = sbr.rel (%p158) target = $region20
        $region19: #{upsample_forward.1} parent=11 // pred_region
          %s162 = ssub.s32 16, 16
          %163 = vsyncadd [#allocation5], %s162
          %s165 = sshll.u32 %s1, 4
          %s166 = int_to_ptr.vmem [resolvable:$true] %s165
          %168 = dma.vmem_to_smem %s166, 16, [#allocation4], [#allocation5]
        $region20: #{upsample_forward.1} parent=11 // pred_fallthru
          _
      $region12: #{upsample_forward.1} parent=5 // pred_fallthru
        _
      %p169 = scmp.lt.s32.totalorder %s12, 2
      // Predicated region
      $region21: #{upsample_forward.1} parent=5 // pred_check
        %p170 = pneg %p169
      $region22: #{upsample_forward.1} parent=5 // pred_check_branch
        %172 = sbr.rel (%p170) target = $region24
      $region23: #{upsample_forward.1} parent=5 // pred_region
        // Predicated region
        $region25: #{upsample_forward.1} parent=23 // pred_check
          %p173 = pneg %p74
        $region26: #{upsample_forward.1} parent=23 // pred_check_branch
          %175 = sbr.rel (%p173) target = $region28
        $region27: #{upsample_forward.1} parent=23 // pred_region
          %p176 = scmp.lt.s32.totalorder %s12, 1
          %s177 = scalar_select %p176, %s12, 1
          %s178 = smul.addr %s177, 8
          %s179 = smul.addr %s178, 8
          %s180 = scalar_lea.vmem %s2, %s179
        $region28: #{upsample_forward.1} parent=23 // pred_fallthru
          _
        // Predicated region
        $region29: #{upsample_forward.1} parent=23 // pred_check
          %p181 = pneg %p100
        $region30: #{upsample_forward.1} parent=23 // pred_check_branch
          %183 = sbr.rel (%p181) target = $region32
        $region31: #{upsample_forward.1} parent=23 // pred_region
          %p184 = scmp.lt.s32.totalorder %s12, 1
          %s185 = scalar_select %p184, %s12, 1
          %s186 = smul.addr %s185, 8
          %s187 = smul.addr %s186, 8
          %s188 = scalar_lea.vmem %s3, %s187
        $region32: #{upsample_forward.1} parent=23 // pred_fallthru
          _
      $region24: #{upsample_forward.1} parent=5 // pred_fallthru
        _
      %p189 = scmp.le.s32.totalorder 1, %s12
      %p190 = scmp.lt.s32.totalorder %s12, 3
      %p191 = pnand %p189, %p190
      %p192 = pneg %p191
      // Predicated region
      $region33: #{upsample_forward.1} parent=5 // pred_check
        _
      $region34: #{upsample_forward.1} parent=5 // pred_check_branch
        %194 = sbr.rel (%p191) target = $region36
      $region35: #{upsample_forward.1} parent=5 // pred_region
        %s195 = ssub.s32 %s12, 1
        // Predicated region
        $region37: #{upsample_forward.1} parent=35 // pred_check
          %p196 = pneg %p33
        $region38: #{upsample_forward.1} parent=35 // pred_check_branch
          %198 = sbr.rel (%p196) target = $region40
        $region39: #{upsample_forward.1} parent=35 // pred_region
          %199 = dma.done [#allocation3], 64
        $region40: #{upsample_forward.1} parent=35 // pred_fallthru
          _
        // Predicated region
        $region41: #{upsample_forward.1} parent=35 // pred_check
          %p200 = pneg %p54
        $region42: #{upsample_forward.1} parent=35 // pred_check_branch
          %202 = sbr.rel (%p200) target = $region44
        $region43: #{upsample_forward.1} parent=35 // pred_region
          %203 = dma.done [#allocation5], 16
        $region44: #{upsample_forward.1} parent=35 // pred_fallthru
          _
        %204 = sfence
        %p205 = pneg %p33
        %p206 = pneg %p30
        %p207 = pneg %p54
        %p208 = pneg %p51
        %p209 = scmp.lt.s32.totalorder %s17, 1
        %s210 = scalar_select %p209, %s17, 1
        %s211 = smul.addr %s210, 8
        %s212 = smul.addr %s211, 8
        %s213 = scalar_lea.vmem %s2, %s212
        %p214 = pneg %p80
        %p215 = pneg %p77
        %p216 = scmp.lt.s32.totalorder %s17, 1
        %s217 = scalar_select %p216, %s17, 1
        %s218 = smul.addr %s217, 8
        %s219 = smul.addr %s218, 8
        %s220 = scalar_lea.vmem %s3, %s219
        %p221 = pneg %p106
        %p222 = pneg %p103
        %p223 = pneg %p132
        %p224 = pneg %p129
        %p225 = scmp.lt.s32.totalorder %s17, 1
        %s226 = scalar_select %p225, %s17, 1
        %s227 = smul.addr %s226, 16
        %s228 = smul.addr %s227, 8
        %s229 = scalar_lea.vmem %s4, %s228
        %p230 = scmp.lt.s32.totalorder %s17, 1
        %s231 = scalar_select %p230, %s17, 1
        %s232 = smul.addr %s231, 8
        %s233 = smul.addr %s232, 8
        %s234 = scalar_lea.vmem %s2, %s233
        %p235 = scmp.lt.s32.totalorder %s17, 1
        %s236 = scalar_select %p235, %s17, 1
        %s237 = smul.addr %s236, 8
        %s238 = smul.addr %s237, 8
        %s239 = scalar_lea.vmem %s3, %s238
        %p240 = scmp.lt.s32.totalorder %s17, 1
        %s241 = scalar_select %p240, %s17, 1
        %s242 = smul.addr %s241, 16
        %s243 = smul.addr %s242, 8
        %s244 = scalar_lea.vmem %s4, %s243
        %v245 = vld [vmem:[%s234] sm:$0xff]
        %v246 = vld [vmem:[%s234 + $0x8] sm:$0xff]
        %s247 = sld [smem:[#allocation2]]
        %v248 = vstv %s247
        %v249 = vmul.f32 %v245, %v248
        %v250 = vmul.f32 %v246, %v248
        %s251 = scalar_lea.vmem %s234, 16
        %v252 = vld [vmem:[%s251] sm:$0xff]
        %v253 = vld [vmem:[%s251 + $0x8] sm:$0xff]
        %s254 = sld [smem:[#allocation2 + $0x1]]
        %v255 = vstv %s254
        %v256 = vmul.f32 %v252, %v255
        %v257 = vmul.f32 %v253, %v255
        %v258 = vadd.f32 %v249, %v256
        %v259 = vadd.f32 %v250, %v257
        %s260 = scalar_lea.vmem %s234, 32
        %v261 = vld [vmem:[%s260] sm:$0xff]
        %v262 = vld [vmem:[%s260 + $0x8] sm:$0xff]
        %s263 = sld [smem:[#allocation2 + $0x2]]
        %v264 = vstv %s263
        %v265 = vmul.f32 %v261, %v264
        %v266 = vmul.f32 %v262, %v264
        %v267 = vadd.f32 %v258, %v265
        %v268 = vadd.f32 %v259, %v266
        %s269 = scalar_lea.vmem %s234, 48
        %v270 = vld [vmem:[%s269] sm:$0xff]
        %v271 = vld [vmem:[%s269 + $0x8] sm:$0xff]
        %s272 = sld [smem:[#allocation2 + $0x3]]
        %v273 = vstv %s272
        %v274 = vmul.f32 %v270, %v273
        %v275 = vmul.f32 %v271, %v273
        %v276 = vadd.f32 %v267, %v274
        %v277 = vadd.f32 %v268, %v275
        %s278 = sld [smem:[#allocation4]]
        %v279 = vstv %s278
        %v280 = vadd.f32 %v276, %v279
        %v281 = vadd.f32 %v277, %v279
        %284 = vrot.lane.b32.xlu0 %v280, 32
        %v285 = vpop.permute.xlu0 %284
        %286 = vrot.lane.b32.xlu0 %v281, 32
        %v287 = vpop.permute.xlu0 %286
        %vm290 = vcmask 261120
        %v291 = vsel %vm290, %v280, %v285
        %v292 = vsel %vm290, %v281, %v287
        %vm293 = vcmask 523264
        %294 = vst.msk [vmem:[%s244] sm:$0xff] %vm293, %v291
        %295 = vst.msk [vmem:[%s244 + $0x8] sm:$0xff] %vm293, %v292
        %v296 = vld [vmem:[%s234] sm:$0xff]
        %v297 = vld [vmem:[%s234 + $0x8] sm:$0xff]
        %s298 = sld [smem:[#allocation2 + $0x80]]
        %v299 = vstv %s298
        %v300 = vmul.f32 %v296, %v299
        %v301 = vmul.f32 %v297, %v299
        %v302 = vld [vmem:[%s251] sm:$0xff]
        %v303 = vld [vmem:[%s251 + $0x8] sm:$0xff]
        %s304 = sld [smem:[#allocation2 + $0x81]]
        %v305 = vstv %s304
        %v306 = vmul.f32 %v302, %v305
        %v307 = vmul.f32 %v303, %v305
        %v308 = vadd.f32 %v300, %v306
        %v309 = vadd.f32 %v301, %v307
        %v310 = vld [vmem:[%s260] sm:$0xff]
        %v311 = vld [vmem:[%s260 + $0x8] sm:$0xff]
        %s312 = sld [smem:[#allocation2 + $0x82]]
        %v313 = vstv %s312
        %v314 = vmul.f32 %v310, %v313
        %v315 = vmul.f32 %v311, %v313
        %v316 = vadd.f32 %v308, %v314
        %v317 = vadd.f32 %v309, %v315
        %v318 = vld [vmem:[%s269] sm:$0xff]
        %v319 = vld [vmem:[%s269 + $0x8] sm:$0xff]
        %s320 = sld [smem:[#allocation2 + $0x83]]
        %v321 = vstv %s320
        %v322 = vmul.f32 %v318, %v321
        %v323 = vmul.f32 %v319, %v321
        %v324 = vadd.f32 %v316, %v322
        %v325 = vadd.f32 %v317, %v323
        %s326 = sld [smem:[#allocation4 + $0x1]]
        %v327 = vstv %s326
        %v328 = vadd.f32 %v324, %v327
        %v329 = vadd.f32 %v325, %v327
        %332 = vrot.lane.b32.xlu0 %v328, 32
        %v333 = vpop.permute.xlu0 %332
        %334 = vrot.lane.b32.xlu0 %v329, 32
        %v335 = vpop.permute.xlu0 %334
        %v338 = vsel %vm290, %v328, %v333
        %v339 = vsel %vm290, %v329, %v335
        %s340 = scalar_lea.vmem %s244, 16
        %341 = vst.msk [vmem:[%s340] sm:$0xff] %vm293, %v338
        %342 = vst.msk [vmem:[%s340 + $0x8] sm:$0xff] %vm293, %v339
        %v343 = vld [vmem:[%s234] sm:$0xff]
        %v344 = vld [vmem:[%s234 + $0x8] sm:$0xff]
        %s345 = sld [smem:[#allocation2 + $0x100]]
        %v346 = vstv %s345
        %v347 = vmul.f32 %v343, %v346
        %v348 = vmul.f32 %v344, %v346
        %v349 = vld [vmem:[%s251] sm:$0xff]
        %v350 = vld [vmem:[%s251 + $0x8] sm:$0xff]
        %s351 = sld [smem:[#allocation2 + $0x101]]
        %v352 = vstv %s351
        %v353 = vmul.f32 %v349, %v352
        %v354 = vmul.f32 %v350, %v352
        %v355 = vadd.f32 %v347, %v353
        %v356 = vadd.f32 %v348, %v354
        %v357 = vld [vmem:[%s260] sm:$0xff]
        %v358 = vld [vmem:[%s260 + $0x8] sm:$0xff]
        %s359 = sld [smem:[#allocation2 + $0x102]]
        %v360 = vstv %s359
        %v361 = vmul.f32 %v357, %v360
        %v362 = vmul.f32 %v358, %v360
        %v363 = vadd.f32 %v355, %v361
        %v364 = vadd.f32 %v356, %v362
        %v365 = vld [vmem:[%s269] sm:$0xff]
        %v366 = vld [vmem:[%s269 + $0x8] sm:$0xff]
        %s367 = sld [smem:[#allocation2 + $0x103]]
        %v368 = vstv %s367
        %v369 = vmul.f32 %v365, %v368
        %v370 = vmul.f32 %v366, %v368
        %v371 = vadd.f32 %v363, %v369
        %v372 = vadd.f32 %v364, %v370
        %s373 = sld [smem:[#allocation4 + $0x2]]
        %v374 = vstv %s373
        %v375 = vadd.f32 %v371, %v374
        %v376 = vadd.f32 %v372, %v374
        %379 = vrot.lane.b32.xlu0 %v375, 32
        %v380 = vpop.permute.xlu0 %379
        %381 = vrot.lane.b32.xlu0 %v376, 32
        %v382 = vpop.permute.xlu0 %381
        %v385 = vsel %vm290, %v375, %v380
        %v386 = vsel %vm290, %v376, %v382
        %s387 = scalar_lea.vmem %s244, 32
        %388 = vst.msk [vmem:[%s387] sm:$0xff] %vm293, %v385
        %389 = vst.msk [vmem:[%s387 + $0x8] sm:$0xff] %vm293, %v386
        %v390 = vld [vmem:[%s234] sm:$0xff]
        %v391 = vld [vmem:[%s234 + $0x8] sm:$0xff]
        %s392 = sld [smem:[#allocation2 + $0x180]]
        %v393 = vstv %s392
        %v394 = vmul.f32 %v390, %v393
        %v395 = vmul.f32 %v391, %v393
        %v396 = vld [vmem:[%s251] sm:$0xff]
        %v397 = vld [vmem:[%s251 + $0x8] sm:$0xff]
        %s398 = sld [smem:[#allocation2 + $0x181]]
        %v399 = vstv %s398
        %v400 = vmul.f32 %v396, %v399
        %v401 = vmul.f32 %v397, %v399
        %v402 = vadd.f32 %v394, %v400
        %v403 = vadd.f32 %v395, %v401
        %v404 = vld [vmem:[%s260] sm:$0xff]
        %v405 = vld [vmem:[%s260 + $0x8] sm:$0xff]
        %s406 = sld [smem:[#allocation2 + $0x182]]
        %v407 = vstv %s406
        %v408 = vmul.f32 %v404, %v407
        %v409 = vmul.f32 %v405, %v407
        %v410 = vadd.f32 %v402, %v408
        %v411 = vadd.f32 %v403, %v409
        %v412 = vld [vmem:[%s269] sm:$0xff]
        %v413 = vld [vmem:[%s269 + $0x8] sm:$0xff]
        %s414 = sld [smem:[#allocation2 + $0x183]]
        %v415 = vstv %s414
        %v416 = vmul.f32 %v412, %v415
        %v417 = vmul.f32 %v413, %v415
        %v418 = vadd.f32 %v410, %v416
        %v419 = vadd.f32 %v411, %v417
        %s420 = sld [smem:[#allocation4 + $0x3]]
        %v421 = vstv %s420
        %v422 = vadd.f32 %v418, %v421
        %v423 = vadd.f32 %v419, %v421
        %426 = vrot.lane.b32.xlu0 %v422, 32
        %v427 = vpop.permute.xlu0 %426
        %428 = vrot.lane.b32.xlu0 %v423, 32
        %v429 = vpop.permute.xlu0 %428
        %v432 = vsel %vm290, %v422, %v427
        %v433 = vsel %vm290, %v423, %v429
        %s434 = scalar_lea.vmem %s244, 48
        %435 = vst.msk [vmem:[%s434] sm:$0xff] %vm293, %v432
        %436 = vst.msk [vmem:[%s434 + $0x8] sm:$0xff] %vm293, %v433
        %v437 = vld [vmem:[%s239] sm:$0xff]
        %v438 = vld [vmem:[%s239 + $0x8] sm:$0xff]
        %v439 = vld [vmem:[%s239 + $0x10] sm:$0xff]
        %v440 = vld [vmem:[%s239 + $0x18] sm:$0xff]
        %v441 = vld [vmem:[%s239 + $0x20] sm:$0xff]
        %v442 = vld [vmem:[%s239 + $0x28] sm:$0xff]
        %v443 = vld [vmem:[%s239 + $0x30] sm:$0xff]
        %v444 = vld [vmem:[%s239 + $0x38] sm:$0xff]
        %s445 = scalar_lea.vmem %s244, 64
        %446 = vst.msk [vmem:[%s445] sm:$0xff] %vm293, %v437
        %447 = vst.msk [vmem:[%s445 + $0x8] sm:$0xff] %vm293, %v438
        %448 = vst.msk [vmem:[%s445 + $0x10] sm:$0xff] %vm293, %v439
        %449 = vst.msk [vmem:[%s445 + $0x18] sm:$0xff] %vm293, %v440
        %450 = vst.msk [vmem:[%s445 + $0x20] sm:$0xff] %vm293, %v441
        %451 = vst.msk [vmem:[%s445 + $0x28] sm:$0xff] %vm293, %v442
        %452 = vst.msk [vmem:[%s445 + $0x30] sm:$0xff] %vm293, %v443
        %453 = vst.msk [vmem:[%s445 + $0x38] sm:$0xff] %vm293, %v444
        %p454 = scmp.lt.s32.totalorder %s17, 1
        %s455 = scalar_select %p454, %s17, 1
        %s456 = smul.addr %s455, 16
        %s457 = smul.addr %s456, 8
        %s458 = scalar_lea.vmem %s4, %s457
        // Predicated region
        $region45: #{upsample_forward.1} parent=35 // pred_check
          %p459 = pneg %p129
        $region46: #{upsample_forward.1} parent=35 // pred_check_branch
          %461 = sbr.rel (%p459) target = $region48
        $region47: #{upsample_forward.1} parent=35 // pred_region
          _
        $region48: #{upsample_forward.1} parent=35 // pred_fallthru
          _
      $region36: #{upsample_forward.1} parent=5 // pred_fallthru
        _
      %p462 = scmp.le.s32.totalorder 2, %s12
      // Predicated region
      $region49: #{upsample_forward.1} parent=5 // pred_check
        %p463 = pneg %p462
      $region50: #{upsample_forward.1} parent=5 // pred_check_branch
        %465 = sbr.rel (%p463) target = $region52
      $region51: #{upsample_forward.1} parent=5 // pred_region
        %s466 = ssub.s32 %s12, 2
        // Predicated region
        $region53: #{upsample_forward.1} parent=51 // pred_check
          %p467 = pneg %p135
        $region54: #{upsample_forward.1} parent=51 // pred_check_branch
          %469 = sbr.rel (%p467) target = $region56
        $region55: #{upsample_forward.1} parent=51 // pred_region
          %p470 = scmp.lt.s32.totalorder %s18, 1
          %s471 = scalar_select %p470, %s18, 1
          %s472 = smul.addr %s471, 16
          %s473 = smul.addr %s472, 8
          %s474 = scalar_lea.vmem %s4, %s473
        $region56: #{upsample_forward.1} parent=51 // pred_fallthru
          _
      $region52: #{upsample_forward.1} parent=5 // pred_fallthru
        _
    $region6: #{upsample_forward.1} parent=1 // loop_footer
      %s16 = sadd.s32 1, %s12
    $region7: #{upsample_forward.1} parent=1 // loop_footer_branch
      %11 = sbr.rel target = $region3
    $region8: #{upsample_forward.1} parent=1 // loop_exit
      _
    %475 = vsyncpa [#allocation3], 1
    %s476 = scalar_lea.sflag [#allocation3], 1
    %477 = vsyncpa %s476, 1
    %478 = vsyncpa [#allocation5], 1

</llo_original>
